<compile_context>
chip_gen: v7x
topology: tpu7x:2x2x1
jax: 0.10.0
libtpu: 0.0.40
codegen_flags: <defaults>
</compile_context>

<pallas_src>
import functools

import jax
import jax.numpy as jnp
from jax import lax
from jax.experimental import pallas as pl
from jax.experimental.pallas import tpu as pltpu


def _round_up(x: int, m: int) -> int:
    return ((x + m - 1) // m) * m


def _ce_partial_sum_kernel(logits_ref, labels_ref, psum_ref, *, n_valid: int):
    """Per-tile cross-entropy partial sums for one lane-dense batch tile.

    logits_ref: (C, TILE_N) float (any float dtype) -- classes on sublanes,
                batch on lanes.
    labels_ref: (1, TILE_N) int32 class indices in [0, C).
    psum_ref:   (1, 128) float32 lane-group partial sums of the per-example
                NLL over this tile (padded columns contribute exactly 0).
    """
    logits = logits_ref[...].astype(jnp.float32)      # (C, TILE_N)
    labels = labels_ref[...]                          # (1, TILE_N) int32
    c, tn = logits.shape

    # Numerically-stable logsumexp over the class (sublane) axis.
    row_max = jnp.max(logits, axis=0, keepdims=True)                     # (1, TILE_N)
    sum_exp = jnp.sum(jnp.exp(logits - row_max), axis=0, keepdims=True)  # (1, TILE_N)
    lse = row_max + jnp.log(sum_exp)                                     # (1, TILE_N)

    # Target logit via sublane-iota select (no one-hot multiply, no log_probs).
    class_ids = lax.broadcasted_iota(jnp.int32, (c, tn), 0)              # (C, TILE_N)
    target_logit = jnp.sum(
        jnp.where(class_ids == labels, logits, 0.0), axis=0, keepdims=True
    )                                                                    # (1, TILE_N)

    nll = lse - target_logit                                             # (1, TILE_N)

    def lane_group_sum(v):
        # (1, TILE_N) -> (1, 128): static vreg selects + VALU adds, no relayout.
        acc = v[:, 0:128]
        for g in range(1, tn // 128):
            acc = acc + v[:, g * 128:(g + 1) * 128]
        return acc

    if n_valid % tn == 0:
        # No overhanging columns anywhere: store partial sums directly.
        psum_ref[...] = lane_group_sum(nll)
    else:
        # Only the last tile can contain padded (garbage) columns; gate the
        # mask work there so full tiles skip the iota/compare/select.
        i = pl.program_id(0)
        last = pl.num_programs(0) - 1

        @pl.when(i != last)
        def _():
            psum_ref[...] = lane_group_sum(nll)

        @pl.when(i == last)
        def _():
            col = i * tn + lax.broadcasted_iota(jnp.int32, (1, tn), 1)
            masked = jnp.where(col < n_valid, nll, 0.0)   # select: safe vs NaN/Inf garbage
            psum_ref[...] = lane_group_sum(masked)


def mnist_loss(out, gt, *, tile_n=None, use_pallas=None, logits_layout="NC"):
    """Cross-entropy loss, mean reduction (== nn.CrossEntropyLoss()(out, gt)).

    out: [N, C] float logits (default "NC" layout), or [C, N] with
         logits_layout="CN" for producers that already emit class-major logits
         (skips the wrapper transpose entirely).
    gt:  [N] integer labels, assumed valid in [0, C).
    """
    if logits_layout == "NC":
        n, c = out.shape
    elif logits_layout == "CN":
        c, n = out.shape
    else:
        raise ValueError(f"unknown logits_layout: {logits_layout}")

    labels = gt.astype(jnp.int32)

    # Small-N fast path: launch/layout overhead dwarfs the work below this size.
    if use_pallas is None:
        use_pallas = (n * c) > 16384
    if not use_pallas:
        logits32 = (out if logits_layout == "NC" else out.T).astype(jnp.float32)
        lse = jax.nn.logsumexp(logits32, axis=-1)
        tgt = jnp.take_along_axis(logits32, labels[:, None], axis=-1)[:, 0]
        return jnp.mean(lse - tgt)

    # Lane-dense (C, N) layout.  With "CN" there is zero wrapper-side copy;
    # with "NC" the single out.T copy is the only layout plumbing (no pad).
    logits_t = out if logits_layout == "CN" else out.T      # (C, N), original dtype
    labels_row = labels.reshape(1, n)                        # (1, N) int32

    if tile_n is None:
        # >= 2 tiles whenever N allows it (v7x megacore sharding on the
        # "parallel" axis), capped at 32768 lanes: double-buffered working set
        # ~6-8 MiB (16-sublane-padded logits + labels), well under the scoped
        # VMEM limit set below on every generation.
        tile_n = max(128, min(_round_up(pl.cdiv(n, 2), 128), 32768))
    else:
        tile_n = max(128, _round_up(tile_n, 128))
    num_tiles = pl.cdiv(n, tile_n)

    itemsize = jnp.dtype(out.dtype).itemsize
    cost = pl.CostEstimate(
        flops=6 * n * c,                       # sub / add / compare / select per logit
        transcendentals=n * c + n,             # exp per logit + log per example
        bytes_accessed=n * c * itemsize + n * 4 + num_tiles * 128 * 4,
    )

    partials = pl.pallas_call(
        functools.partial(_ce_partial_sum_kernel, n_valid=n),
        out_shape=jax.ShapeDtypeStruct((1, num_tiles * 128), jnp.float32),
        grid=(num_tiles,),
        in_specs=[
            pl.BlockSpec((c, tile_n), lambda i: (0, i)),
            pl.BlockSpec((1, tile_n), lambda i: (0, i)),
        ],
        out_specs=pl.BlockSpec((1, 128), lambda i: (0, i)),
        compiler_params=pltpu.CompilerParams(
            dimension_semantics=("parallel",),
            vmem_limit_bytes=32 * 1024 * 1024,
        ),
        cost_estimate=cost,
    )(logits_t, labels_row)

    # num_tiles*128-element sum in plain JAX, times a compile-time 1/N constant.
    return jnp.sum(partials) * (1.0 / n)


def _reference_loss(logits, labels):
    logp = jax.nn.log_softmax(logits.astype(jnp.float32), axis=-1)
    return -jnp.mean(logp[jnp.arange(logits.shape[0]), labels])


if __name__ == "__main__":
    key = jax.random.PRNGKey(0)
    k1, k2, k3, k4 = jax.random.split(key, 4)

    # MNIST-like small shapes: batch=8, 10 classes.
    N, C = 8, 10
    logits = jax.random.normal(k1, (N, C), dtype=jnp.float32)
    labels = jax.random.randint(k2, (N,), 0, C, dtype=jnp.int32)
    ref = _reference_loss(logits, labels)

    # Auto path (small-N fast path: fused XLA, no Pallas launch).
    loss_auto = mnist_loss(logits, labels)
    jax.block_until_ready(loss_auto)
    assert jnp.allclose(loss_auto, ref, atol=1e-5, rtol=1e-5), (loss_auto, ref)

    # Forced Pallas path at the MNIST shape (single overhanging tile + mask branch).
    loss_k = mnist_loss(logits, labels, use_pallas=True)
    jax.block_until_ready(loss_k)
    assert jnp.allclose(loss_k, ref, atol=1e-5, rtol=1e-5), (loss_k, ref)

    # Multi-tile + remainder masking + per-tile partial-sum outputs
    # (3 tiles of 128, last tile only 44 valid columns).
    N2, C2 = 300, 10
    logits2 = jax.random.normal(k3, (N2, C2), dtype=jnp.float32)
    labels2 = jax.random.randint(k4, (N2,), 0, C2, dtype=jnp.int32)
    ref2 = _reference_loss(logits2, labels2)
    loss2 = mnist_loss(logits2, labels2, tile_n=128, use_pallas=True)
    jax.block_until_ready(loss2)
    assert jnp.allclose(loss2, ref2, atol=1e-5, rtol=1e-5), (loss2, ref2)

    # Zero-copy class-major producer contract: no wrapper transpose, no pad.
    loss2_cn = mnist_loss(logits2.T, labels2, tile_n=128, use_pallas=True,
                          logits_layout="CN")
    jax.block_until_ready(loss2_cn)
    assert jnp.allclose(loss2_cn, ref2, atol=1e-5, rtol=1e-5), (loss2_cn, ref2)

    # Mixed precision: bf16 logits cast to f32 on the VPU inside the kernel.
    logits2_bf16 = logits2.astype(jnp.bfloat16)
    ref2_bf16 = _reference_loss(logits2_bf16, labels2)
    loss2_bf16 = mnist_loss(logits2_bf16, labels2, use_pallas=True)
    jax.block_until_ready(loss2_bf16)
    assert jnp.allclose(loss2_bf16, ref2_bf16, atol=1e-4, rtol=1e-4), (loss2_bf16, ref2_bf16)

    print("KERNEL_OK")
</pallas_src>

<mosaic_0001>
module attributes {stable_mosaic.version = 11 : i64} {
  func.func @_ce_partial_sum_kernel(%arg0: i32, %arg1: memref<10x128xf32, #tpu.memory_space<vmem>>, %arg2: memref<1x128xi32, #tpu.memory_space<vmem>>, %arg3: memref<1x128xf32, #tpu.memory_space<vmem>>) attributes {dimension_semantics = [#tpu.dimension_semantics<parallel>], iteration_bounds = array<i64: 1>, scalar_prefetch = 0 : i64, scratch_operands = 0 : i64, tpu.core_type = #tpu.core_type<tc>, window_params = [{transform_indices = @transform_0, window_bounds = array<i64: 10, 128>}, {transform_indices = @transform_1, window_bounds = array<i64: 1, 128>}, {transform_indices = @transform_2, window_bounds = array<i64: 1, 128>}]} {
    %c0 = arith.constant 0 : index
    %c0_0 = arith.constant 0 : index
    %0 = vector.load %arg1[%c0, %c0_0] : memref<10x128xf32, #tpu.memory_space<vmem>>, vector<10x128xf32>
    %c0_1 = arith.constant 0 : index
    %c0_2 = arith.constant 0 : index
    %1 = vector.load %arg2[%c0_1, %c0_2] : memref<1x128xi32, #tpu.memory_space<vmem>>, vector<1x128xi32>
    %cst = arith.constant dense<0xFF800000> : vector<128xf32>
    %2 = vector.multi_reduction <maximumf>, %0, %cst [0] : vector<10x128xf32> to vector<128xf32>
    %3 = vector.shape_cast %2 : vector<128xf32> to vector<1x128xf32>
    %4 = vector.broadcast %3 : vector<1x128xf32> to vector<10x128xf32>
    %5 = arith.subf %0, %4 : vector<10x128xf32>
    %6 = math.exp %5 : vector<10x128xf32>
    %cst_3 = arith.constant dense<0.000000e+00> : vector<128xf32>
    %7 = vector.multi_reduction <add>, %6, %cst_3 [0] : vector<10x128xf32> to vector<128xf32>
    %8 = vector.shape_cast %7 : vector<128xf32> to vector<1x128xf32>
    %9 = math.log %8 : vector<1x128xf32>
    %10 = arith.addf %3, %9 : vector<1x128xf32>
    %11 = tpu.iota {dimensions = array<i32: 0>} : vector<10x128xi32>
    %12 = vector.broadcast %1 : vector<1x128xi32> to vector<10x128xi32>
    %13 = arith.cmpi eq, %11, %12 : vector<10x128xi32>
    %cst_4 = arith.constant 0.000000e+00 : f32
    %14 = vector.broadcast %cst_4 : f32 to vector<10x128xf32>
    %15 = arith.select %13, %0, %14 : vector<10x128xi1>, vector<10x128xf32>
    %cst_5 = arith.constant dense<0.000000e+00> : vector<128xf32>
    %16 = vector.multi_reduction <add>, %15, %cst_5 [0] : vector<10x128xf32> to vector<128xf32>
    %17 = vector.shape_cast %16 : vector<128xf32> to vector<1x128xf32>
    %18 = arith.subf %10, %17 : vector<1x128xf32>
    %c0_i32 = arith.constant 0 : i32
    %19 = arith.cmpi ne, %arg0, %c0_i32 : i32
    %20 = arith.extui %19 : i1 to i32
    %c0_i32_6 = arith.constant 0 : i32
    %21 = arith.cmpi ne, %20, %c0_i32_6 : i32
    scf.if %21 {
      %c0_9 = arith.constant 0 : index
      %c0_10 = arith.constant 0 : index
      %25 = vector.load %arg3[%c0_9, %c0_10] : memref<1x128xf32, #tpu.memory_space<vmem>>, vector<1x128xf32>
      tpu.vector_store %arg3[%c0_9, %c0_10], %18 {strides = array<i32>} : memref<1x128xf32, #tpu.memory_space<vmem>>, vector<1x128xf32>,
    } else {
    }
    %c0_i32_7 = arith.constant 0 : i32
    %22 = arith.cmpi eq, %arg0, %c0_i32_7 : i32
    %23 = arith.extui %22 : i1 to i32
    %c0_i32_8 = arith.constant 0 : i32
    %24 = arith.cmpi ne, %23, %c0_i32_8 : i32
    scf.if %24 {
      %c128_i32 = arith.constant 128 : i32
      %25 = arith.muli %arg0, %c128_i32 : i32
      %26 = tpu.iota {dimensions = array<i32: 1>} : vector<1x128xi32>
      %27 = vector.broadcast %25 : i32 to vector<1x128xi32>
      %28 = arith.addi %27, %26 : vector<1x128xi32>
      %c8_i32 = arith.constant 8 : i32
      %29 = vector.broadcast %c8_i32 : i32 to vector<1x128xi32>
      %30 = arith.cmpi slt, %28, %29 : vector<1x128xi32>
      %cst_9 = arith.constant 0.000000e+00 : f32
      %31 = vector.broadcast %cst_9 : f32 to vector<1x128xf32>
      %32 = arith.select %30, %18, %31 : vector<1x128xi1>, vector<1x128xf32>
      %c0_10 = arith.constant 0 : index
      %c0_11 = arith.constant 0 : index
      %33 = vector.load %arg3[%c0_10, %c0_11] : memref<1x128xf32, #tpu.memory_space<vmem>>, vector<1x128xf32>
      tpu.vector_store %arg3[%c0_10, %c0_11], %32 {strides = array<i32>} : memref<1x128xf32, #tpu.memory_space<vmem>>, vector<1x128xf32>,
    } else {
    }
    return
  }
  func.func @transform_0(%arg0: i32) -> (i32, i32) {
    %c0_i32 = arith.constant 0 : i32
    %c0_i32_0 = arith.constant 0 : i32
    return %c0_i32, %arg0 : i32, i32
  }
  func.func @transform_1(%arg0: i32) -> (i32, i32) {
    %c0_i32 = arith.constant 0 : i32
    %c0_i32_0 = arith.constant 0 : i32
    return %c0_i32, %arg0 : i32, i32
  }
  func.func @transform_2(%arg0: i32) -> (i32, i32) {
    %c0_i32 = arith.constant 0 : i32
    %c0_i32_0 = arith.constant 0 : i32
    return %c0_i32, %arg0 : i32, i32
  }
}

</mosaic_0001>

<llo_original>
// kernel: tpu_custom_call.1
$region0: #{tpu_custom_call.1}
  #allocation0 [shape = 'u32[]', space=smem, size = 0x4, offset = 0x4, fixed_abs, tag = 'smem constant byte address 0x4 - core index']
  #allocation1 [shape = 'u32[144,128]{1,0:T(1,128)}', space=vmem, size = 0x12000, scoped, tag = 'internal scratch']
  %s0 = inlined_call_operand.vmem [shape: f32[10,8], index: 0, kind: input, shape index: {}]
  %s1 = inlined_call_operand.vmem [shape: s32[1,8], index: 1, kind: input, shape index: {}]
  %s2 = inlined_call_operand.hbm [shape: f32[1,128], index: 2, kind: output, shape index: {}]
  %s3 = sld [smem:[#allocation0]]
  $region26: #{tpu_custom_call.1} parent=0
    _
  %s5 = ssub.s32 1, %s3
  %s6 = scalar_select 0, %s5, %s3
  $region1: #{tpu_custom_call.1} parent=0
    #allocation2 [shape = 'u8[512]{0}', space=vmem, size = 0x400, scoped, tag = 'output window, operand 0, single buffered']
    #allocation3 [shape = 's32[1]{0}', space=sflag, size = 0x4, scoped, tag = 'scoped memory for tpu_custom_call.1']
    %7 = vsyncpa [#allocation3], 0
    // Predicated region
    $region2: #{tpu_custom_call.1} parent=1 // pred_check
      _
    $region3: #{tpu_custom_call.1} parent=1 // pred_check_branch
      %9 = sbr.rel (0) target = $region5
    $region4: #{tpu_custom_call.1} parent=1 // pred_region
      _
    $region5: #{tpu_custom_call.1} parent=1 // pred_fallthru
      _
    // Predicated region
    $region6: #{tpu_custom_call.1} parent=1 // pred_check
      _
    $region7: #{tpu_custom_call.1} parent=1 // pred_check_branch
      %11 = sbr.rel (0) target = $region9
    $region8: #{tpu_custom_call.1} parent=1 // pred_region
      _
    $region9: #{tpu_custom_call.1} parent=1 // pred_fallthru
      _
    %v12 = vld [vmem:[%s0] sm:$0xff]
    %v13 = vld [vmem:[%s0 + $0x8] sm:$0x3]
    %v14 = vld [vmem:[%s1] sm:$0x1]
    %vm15 = vcmask 1041408
    %v16 = vsel %vm15, %v13, -inf
    %v17 = vmax.f32 %v12, %v16
    %v18 = vrot.slane %v17, 4
    %v19 = vmax.f32 %v17, %v18
    %v20 = vrot.slane %v19, 2
    %v21 = vmax.f32 %v19, %v20
    %v22 = vrot.slane %v21, 1
    %v23 = vmax.f32 %v21, %v22
    %v24 = vsub.f32 %v12, %v23
    %v25 = vsub.f32 %v13, %v23
    %v26 = vmul.f32 %v24, 1.442695
    %v27 = vpow.pop %v26
    %v28 = vmul.f32 %v25, 1.442695
    %v29 = vpow.pop %v28
    %v30 = vsel %vm15, %v29, 0.0
    %v31 = vadd.f32 %v27, %v30
    %v32 = vrot.slane %v31, 4
    %v33 = vadd.f32 %v31, %v32
    %v34 = vrot.slane %v33, 2
    %v35 = vadd.f32 %v33, %v34
    %v36 = vrot.slane %v35, 1
    %v37 = vadd.f32 %v35, %v36
    %v38 = vlog2.pop %v37
    %v39 = vmul.f32 %v38, 0.6931472
    %v40 = vadd.f32 %v23, %v39
    %v41 = vlaneseq
    %v42 = vshrl.u32 %v41, 7
    %v43 = vadd.s32 %v42, 8
    %v44 = vlaneseq
    %v45 = vshrl.u32 %v44, 7
    %v46 = vsub.s32 0, %v45
    %v47 = vrot.slane %v14, %v46
    %vm48 = vcmp.eq.s32.totalorder %v42, %v47
    %vm49 = vcmp.eq.s32.totalorder %v43, %v47
    %v50 = vsel %vm48, %v12, 0.0
    %v51 = vsel %vm49, %v13, 0.0
    %v52 = vsel %vm15, %v51, 0.0
    %v53 = vadd.f32 %v50, %v52
    %v54 = vrot.slane %v53, 4
    %v55 = vadd.f32 %v53, %v54
    %v56 = vrot.slane %v55, 2
    %v57 = vadd.f32 %v55, %v56
    %v58 = vrot.slane %v57, 1
    %v59 = vadd.f32 %v57, %v58
    %v60 = vsub.f32 %v40, %v59
    %p61 = scmp.ne.s32.totalorder 0, 0
    // Predicated region
    $region10: #{tpu_custom_call.1} parent=1 // pred_check
      %p62 = pneg %p61
    $region11: #{tpu_custom_call.1} parent=1 // pred_check_branch
      %64 = sbr.rel (%p62) target = $region13
    $region12: #{tpu_custom_call.1} parent=1 // pred_region
      %65 = vst [vmem:[#allocation2] sm:$0x1] %v60
    $region13: #{tpu_custom_call.1} parent=1 // pred_fallthru
      _
    %p66 = scmp.eq.s32.totalorder 0, 0
    // Predicated region
    $region14: #{tpu_custom_call.1} parent=1 // pred_check
      %p67 = pneg %p66
    $region15: #{tpu_custom_call.1} parent=1 // pred_check_branch
      %69 = sbr.rel (%p67) target = $region17
    $region16: #{tpu_custom_call.1} parent=1 // pred_region
      %s70 = smul.u32 0, 128
      %v71 = vlaneseq
      %v72 = vand.u32 %v71, 127
      %v73 = vstv %s70
      %v74 = vadd.s32 %v73, %v72
      %vm75 = vcmp.lt.s32.totalorder %v74, 8
      %v76 = vsel %vm75, %v60, 0.0
      %77 = vst [vmem:[#allocation2] sm:$0x1] %v76
    $region17: #{tpu_custom_call.1} parent=1 // pred_fallthru
      _
    // Predicated region
    $region18: #{tpu_custom_call.1} parent=1 // pred_check
      _
    $region19: #{tpu_custom_call.1} parent=1 // pred_check_branch
      %79 = sbr.rel (0) target = $region21
    $region20: #{tpu_custom_call.1} parent=1 // pred_region
      %s81 = ssub.s32 16, 16
      %82 = vsyncadd [#allocation3], %s81
      %s84 = sshll.u32 [#allocation2], 4
      %s85 = int_to_ptr.vmem [resolvable:$true] %s84
      %87 = dma.vmem_to_hbm [thread:$0]  %s85, 16, %s2, [#allocation3]
    $region21: #{tpu_custom_call.1} parent=1 // pred_fallthru
      _
    // Predicated region
    $region22: #{tpu_custom_call.1} parent=1 // pred_check
      _
    $region23: #{tpu_custom_call.1} parent=1 // pred_check_branch
      %89 = sbr.rel (0) target = $region25
    $region24: #{tpu_custom_call.1} parent=1 // pred_region
      %90 = dma.done [#allocation3], 16
    $region25: #{tpu_custom_call.1} parent=1 // pred_fallthru
      _
    %91 = vsyncpa [#allocation3], 1

</llo_original>
